<compile_context>
chip_gen: v5e
topology: v5e:2x2
jax: 0.10.0
libtpu: 0.0.40
codegen_flags: <defaults>
</compile_context>

<pallas_src>
import math
import jax
import jax.numpy as jnp
from jax.experimental import pallas as pl
from jax.experimental.pallas import tpu as pltpu


def _round_up(x, m):
    return ((x + m - 1) // m) * m


def hazard_mlp_kernel(x_ref, w1_ref, b1_ref, w2_ref, b2_ref, w3_ref, b3_ref, o_ref):
    """One batch-group tile of the fused MLP (lane-packed / block-diagonal form).

    Each row of x_ref holds `fold` consecutive batch rows concatenated along
    lanes; weights are kron(I_fold, W) so each batch row only interacts with
    its own diagonal block. MXU inputs are bf16, accumulation and all
    element-wise math are f32.
    """
    x = x_ref[...]                                               # (TG, fold*D) bf16
    h = jnp.dot(x, w1_ref[...], preferred_element_type=jnp.float32) + b1_ref[...]
    h = jnp.maximum(h, 0.0)                                      # f32
    h = jnp.dot(h.astype(jnp.bfloat16), w2_ref[...],
                preferred_element_type=jnp.float32) + b2_ref[...]
    h = jnp.maximum(h, 0.0)                                      # f32
    h = jnp.dot(h.astype(jnp.bfloat16), w3_ref[...],
                preferred_element_type=jnp.float32) + b3_ref[...]
    o_ref[...] = jax.nn.sigmoid(h).astype(o_ref.dtype)


def _mlp_reference_f32(x, w1, b1, w2, b2, w3, b3):
    """Exact f32 module semantics (also the small-batch fast path)."""
    h = jnp.maximum(x @ w1 + jnp.reshape(b1, (1, -1)), 0.0)
    h = jnp.maximum(h @ w2 + jnp.reshape(b2, (1, -1)), 0.0)
    return jax.nn.sigmoid(h @ w3 + jnp.reshape(b3, (1, -1)))


def _pick_fold(D, H1, H2, NW, max_packed_dim=256):
    """Largest fold in {1,2,4,8} keeping every packed dim <= 256 (MXU tile)."""
    fold = 1
    for r in (2, 4, 8):
        if r * max(D, H1, H2, NW) <= max_packed_dim:
            fold = r
    return fold


def hazard_predictor_forward(x, w1, b1, w2, b2, w3, b3, *,
                             max_tile_b=4096, small_batch_threshold=512,
                             force_pallas=False):
    """Fused MLP forward.

    x: (B, D) float32 embeddings.
    w*: (in_dim, out_dim) weights (transposed from PyTorch); b*: (out_dim,) or
    (1, out_dim) biases. Returns (B, num_windows) float32 hazard probabilities.
    """
    B, D = x.shape
    H1 = w1.shape[1]
    H2 = w2.shape[1]
    NW = w3.shape[1]

    if not force_pallas and B < small_batch_threshold:
        # Tiny batches: fixed pallas_call/pipeline overhead dwarfs the work;
        # plain XLA fusion (exact f32 module semantics) is strictly better.
        return _mlp_reference_f32(x, w1, b1, w2, b2, w3, b3)

    fold = _pick_fold(D, H1, H2, NW)

    # ---- tile / grid selection (group rows = batch rows / fold) ------------
    G = pl.cdiv(B, fold)                         # group rows actually needed
    max_tile_g = max(16, max_tile_b // fold)
    # Balance tiles (no ~2x padded work for B just above a tile multiple) and
    # force >=2 grid steps so ("parallel",) shards the batch across both
    # TensorCores on v7x.
    num_tiles = max(2, pl.cdiv(G, max_tile_g))
    tile_g = _round_up(pl.cdiv(G, num_tiles), 16)    # bf16 native sublane tile
    Gp = num_tiles * tile_g
    Bp = Gp * fold

    # ---- operand prep (outside the kernel; contiguous reshapes are free) ---
    if Bp != B:
        # Padded rows are harmless: block-diagonal weights keep them isolated,
        # they compute sigmoid(bias-only) values and are sliced off below.
        x = jnp.pad(x, ((0, Bp - B), (0, 0)))
    x_packed = x.reshape(Gp, fold * D).astype(jnp.bfloat16)

    def blockdiag(w):
        return jnp.kron(jnp.eye(fold, dtype=w.dtype), w).astype(jnp.bfloat16)

    def tile_bias(b, n):
        return jnp.tile(jnp.reshape(b, (1, n)).astype(jnp.float32), (1, fold))

    w1p, w2p, w3p = blockdiag(w1), blockdiag(w2), blockdiag(w3)
    b1p, b2p, b3p = tile_bias(b1, H1), tile_bias(b2, H2), tile_bias(b3, NW)

    const = lambda shape: pl.BlockSpec(shape, lambda i: (0, 0))  # resident in VMEM

    out_packed = pl.pallas_call(
        hazard_mlp_kernel,
        out_shape=jax.ShapeDtypeStruct((Gp, fold * NW), jnp.float32),
        grid=(num_tiles,),
        in_specs=[
            pl.BlockSpec((tile_g, fold * D), lambda i: (i, 0)),   # x: batch-tiled
            const((fold * D, fold * H1)), const((1, fold * H1)),
            const((fold * H1, fold * H2)), const((1, fold * H2)),
            const((fold * H2, fold * NW)), const((1, fold * NW)),
        ],
        out_specs=pl.BlockSpec((tile_g, fold * NW), lambda i: (i, 0)),
        compiler_params=pltpu.CompilerParams(
            dimension_semantics=("parallel",)),   # shard batch across TCs on v7x
    )(x_packed, w1p, b1p, w2p, b2p, w3p, b3p)

    # Unpack lanes back to (Bp, NW) and drop padded rows.
    return out_packed.reshape(Bp, NW)[:B]


def init_linear(key, in_dim, out_dim):
    """Deterministic init mimicking PyTorch nn.Linear default (uniform +-1/sqrt(in)).
    Returns weight as (in_dim, out_dim) and bias as (1, out_dim)."""
    kw, kb = jax.random.split(key)
    bound = 1.0 / math.sqrt(in_dim)
    w = jax.random.uniform(kw, (in_dim, out_dim), jnp.float32, -bound, bound)
    b = jax.random.uniform(kb, (1, out_dim), jnp.float32, -bound, bound)
    return w, b


if __name__ == "__main__":
    # Module configuration (small, consistent with the forward pass):
    embedding_dim = 32
    hidden_dims = [64, 32]
    window_size = 1.0
    max_surv_time = 16.0
    num_windows = math.ceil(max_surv_time / window_size)  # 16

    key = jax.random.PRNGKey(0)
    k_x, k1, k2, k3 = jax.random.split(key, 4)

    w1, b1 = init_linear(k1, embedding_dim, hidden_dims[0])
    w2, b2 = init_linear(k2, hidden_dims[0], hidden_dims[1])
    w3, b3 = init_linear(k3, num_windows and hidden_dims[1], num_windows)

    # --- Pallas path (forced so the kernel definitely runs) ----------------
    batch = 256
    x = jax.random.normal(k_x, (batch, embedding_dim), jnp.float32)
    out = hazard_predictor_forward(x, w1, b1, w2, b2, w3, b3, force_pallas=True)
    out = jax.block_until_ready(out)
    assert out.shape == (batch, num_windows)
    assert bool(jnp.all((out >= 0.0) & (out <= 1.0)))

    # Reference 1: same bf16-input / f32-accumulate recipe as the kernel.
    xb = x.astype(jnp.bfloat16)
    h = jnp.maximum(
        jnp.dot(xb, w1.astype(jnp.bfloat16), preferred_element_type=jnp.float32) + b1, 0.0)
    h = jnp.maximum(
        jnp.dot(h.astype(jnp.bfloat16), w2.astype(jnp.bfloat16),
                preferred_element_type=jnp.float32) + b2, 0.0)
    ref_bf16 = jax.nn.sigmoid(
        jnp.dot(h.astype(jnp.bfloat16), w3.astype(jnp.bfloat16),
                preferred_element_type=jnp.float32) + b3)
    assert jnp.allclose(out, ref_bf16, atol=2e-3, rtol=2e-3)

    # Reference 2: full-f32 module semantics (looser tolerance: bf16 MXU inputs).
    ref_f32 = _mlp_reference_f32(x, w1, b1, w2, b2, w3, b3)
    assert jnp.allclose(out, ref_f32, atol=5e-2, rtol=5e-2)

    # --- Small-batch fast path (pure JAX, exact module semantics) ----------
    x_small = jax.random.normal(k_x, (8, embedding_dim), jnp.float32)
    out_small = jax.block_until_ready(
        hazard_predictor_forward(x_small, w1, b1, w2, b2, w3, b3))
    assert out_small.shape == (8, num_windows)
    assert jnp.allclose(
        out_small, _mlp_reference_f32(x_small, w1, b1, w2, b2, w3, b3),
        atol=1e-6, rtol=1e-6)

    print("KERNEL_OK")
</pallas_src>

<mosaic_0001>
module attributes {stable_mosaic.version = 11 : i64} {
  func.func @hazard_mlp_kernel(%arg0: i32, %arg1: memref<32x128xbf16, #tpu.memory_space<vmem>>, %arg2: memref<128x256xbf16, #tpu.memory_space<vmem>>, %arg3: memref<1x256xf32, #tpu.memory_space<vmem>>, %arg4: memref<256x128xbf16, #tpu.memory_space<vmem>>, %arg5: memref<1x128xf32, #tpu.memory_space<vmem>>, %arg6: memref<128x64xbf16, #tpu.memory_space<vmem>>, %arg7: memref<1x64xf32, #tpu.memory_space<vmem>>, %arg8: memref<32x64xf32, #tpu.memory_space<vmem>>) attributes {dimension_semantics = [#tpu.dimension_semantics<parallel>], iteration_bounds = array<i64: 2>, scalar_prefetch = 0 : i64, scratch_operands = 0 : i64, tpu.core_type = #tpu.core_type<tc>, window_params = [{transform_indices = @transform_0, window_bounds = array<i64: 32, 128>}, {pipeline_mode = #tpu.pipeline_mode<synchronous>, transform_indices = @transform_1, window_bounds = array<i64: 128, 256>}, {pipeline_mode = #tpu.pipeline_mode<synchronous>, transform_indices = @transform_2, window_bounds = array<i64: 1, 256>}, {pipeline_mode = #tpu.pipeline_mode<synchronous>, transform_indices = @transform_3, window_bounds = array<i64: 256, 128>}, {pipeline_mode = #tpu.pipeline_mode<synchronous>, transform_indices = @transform_4, window_bounds = array<i64: 1, 128>}, {pipeline_mode = #tpu.pipeline_mode<synchronous>, transform_indices = @transform_5, window_bounds = array<i64: 128, 64>}, {pipeline_mode = #tpu.pipeline_mode<synchronous>, transform_indices = @transform_6, window_bounds = array<i64: 1, 64>}, {transform_indices = @transform_7, window_bounds = array<i64: 32, 64>}]} {
    %c0 = arith.constant 0 : index
    %c0_0 = arith.constant 0 : index
    %0 = vector.load %arg1[%c0, %c0_0] : memref<32x128xbf16, #tpu.memory_space<vmem>>, vector<32x128xbf16>
    %c0_1 = arith.constant 0 : index
    %c0_2 = arith.constant 0 : index
    %1 = vector.load %arg2[%c0_1, %c0_2] : memref<128x256xbf16, #tpu.memory_space<vmem>>, vector<128x256xbf16>
    %cst = arith.constant dense<0.000000e+00> : vector<32x256xf32>
    %2 = tpu.matmul %0, %1, %cst {dimension_numbers = #tpu.dot_dimension_numbers<[1], [0], [0], [1], [0, 0, 1, 1], [], []>} : vector<32x128xbf16>, vector<128x256xbf16>, vector<32x256xf32> -> vector<32x256xf32>
    %c0_3 = arith.constant 0 : index
    %c0_4 = arith.constant 0 : index
    %3 = vector.load %arg3[%c0_3, %c0_4] : memref<1x256xf32, #tpu.memory_space<vmem>>, vector<1x256xf32>
    %4 = vector.broadcast %3 : vector<1x256xf32> to vector<32x256xf32>
    %5 = arith.addf %2, %4 : vector<32x256xf32>
    %cst_5 = arith.constant 0.000000e+00 : f32
    %6 = vector.broadcast %cst_5 : f32 to vector<32x256xf32>
    %7 = arith.maximumf %5, %6 : vector<32x256xf32>
    %8 = arith.truncf %7 : vector<32x256xf32> to vector<32x256xbf16>
    %c0_6 = arith.constant 0 : index
    %c0_7 = arith.constant 0 : index
    %9 = vector.load %arg4[%c0_6, %c0_7] : memref<256x128xbf16, #tpu.memory_space<vmem>>, vector<256x128xbf16>
    %cst_8 = arith.constant dense<0.000000e+00> : vector<32x128xf32>
    %10 = tpu.matmul %8, %9, %cst_8 {dimension_numbers = #tpu.dot_dimension_numbers<[1], [0], [0], [1], [0, 0, 1, 1], [], []>} : vector<32x256xbf16>, vector<256x128xbf16>, vector<32x128xf32> -> vector<32x128xf32>
    %c0_9 = arith.constant 0 : index
    %c0_10 = arith.constant 0 : index
    %11 = vector.load %arg5[%c0_9, %c0_10] : memref<1x128xf32, #tpu.memory_space<vmem>>, vector<1x128xf32>
    %12 = vector.broadcast %11 : vector<1x128xf32> to vector<32x128xf32>
    %13 = arith.addf %10, %12 : vector<32x128xf32>
    %cst_11 = arith.constant 0.000000e+00 : f32
    %14 = vector.broadcast %cst_11 : f32 to vector<32x128xf32>
    %15 = arith.maximumf %13, %14 : vector<32x128xf32>
    %16 = arith.truncf %15 : vector<32x128xf32> to vector<32x128xbf16>
    %c0_12 = arith.constant 0 : index
    %c0_13 = arith.constant 0 : index
    %17 = vector.load %arg6[%c0_12, %c0_13] : memref<128x64xbf16, #tpu.memory_space<vmem>>, vector<128x64xbf16>
    %cst_14 = arith.constant dense<0.000000e+00> : vector<32x64xf32>
    %18 = tpu.matmul %16, %17, %cst_14 {dimension_numbers = #tpu.dot_dimension_numbers<[1], [0], [0], [1], [0, 0, 1, 1], [], []>} : vector<32x128xbf16>, vector<128x64xbf16>, vector<32x64xf32> -> vector<32x64xf32>
    %c0_15 = arith.constant 0 : index
    %c0_16 = arith.constant 0 : index
    %19 = vector.load %arg7[%c0_15, %c0_16] : memref<1x64xf32, #tpu.memory_space<vmem>>, vector<1x64xf32>
    %20 = vector.broadcast %19 : vector<1x64xf32> to vector<32x64xf32>
    %21 = arith.addf %18, %20 : vector<32x64xf32>
    %22 = arith.negf %21 : vector<32x64xf32>
    %23 = math.exp %22 : vector<32x64xf32>
    %cst_17 = arith.constant 1.000000e+00 : f32
    %24 = vector.broadcast %cst_17 : f32 to vector<32x64xf32>
    %25 = arith.addf %24, %23 : vector<32x64xf32>
    %26 = arith.divf %24, %25 : vector<32x64xf32>
    %c0_18 = arith.constant 0 : index
    %c0_19 = arith.constant 0 : index
    %27 = vector.load %arg8[%c0_18, %c0_19] : memref<32x64xf32, #tpu.memory_space<vmem>>, vector<32x64xf32>
    tpu.vector_store %arg8[%c0_18, %c0_19], %26 {strides = array<i32>} : memref<32x64xf32, #tpu.memory_space<vmem>>, vector<32x64xf32>,
    return
  }
  func.func @transform_0(%arg0: i32) -> (i32, i32) {
    %c0_i32 = arith.constant 0 : i32
    %c0_i32_0 = arith.constant 0 : i32
    return %arg0, %c0_i32 : i32, i32
  }
  func.func @transform_1(%arg0: i32) -> (i32, i32) {
    %c0_i32 = arith.constant 0 : i32
    %c0_i32_0 = arith.constant 0 : i32
    %c0_i32_1 = arith.constant 0 : i32
    return %c0_i32, %c0_i32_0 : i32, i32
  }
  func.func @transform_2(%arg0: i32) -> (i32, i32) {
    %c0_i32 = arith.constant 0 : i32
    %c0_i32_0 = arith.constant 0 : i32
    %c0_i32_1 = arith.constant 0 : i32
    return %c0_i32, %c0_i32_0 : i32, i32
  }
  func.func @transform_3(%arg0: i32) -> (i32, i32) {
    %c0_i32 = arith.constant 0 : i32
    %c0_i32_0 = arith.constant 0 : i32
    %c0_i32_1 = arith.constant 0 : i32
    return %c0_i32, %c0_i32_0 : i32, i32
  }
  func.func @transform_4(%arg0: i32) -> (i32, i32) {
    %c0_i32 = arith.constant 0 : i32
    %c0_i32_0 = arith.constant 0 : i32
    %c0_i32_1 = arith.constant 0 : i32
    return %c0_i32, %c0_i32_0 : i32, i32
  }
  func.func @transform_5(%arg0: i32) -> (i32, i32) {
    %c0_i32 = arith.constant 0 : i32
    %c0_i32_0 = arith.constant 0 : i32
    %c0_i32_1 = arith.constant 0 : i32
    return %c0_i32, %c0_i32_0 : i32, i32
  }
  func.func @transform_6(%arg0: i32) -> (i32, i32) {
    %c0_i32 = arith.constant 0 : i32
    %c0_i32_0 = arith.constant 0 : i32
    %c0_i32_1 = arith.constant 0 : i32
    return %c0_i32, %c0_i32_0 : i32, i32
  }
  func.func @transform_7(%arg0: i32) -> (i32, i32) {
    %c0_i32 = arith.constant 0 : i32
    %c0_i32_0 = arith.constant 0 : i32
    return %arg0, %c0_i32 : i32, i32
  }
}

</mosaic_0001>

<llo_original>
// kernel: tpu_custom_call.1
$region0: #{tpu_custom_call.1}
  #allocation0 [shape = 'u32[]', space=smem, size = 0x4, offset = 0x4, fixed_abs, tag = 'smem constant byte address 0x4 - core index']
  #allocation1 [shape = 'u32[72,128]{1,0:T(1,128)}', space=vmem, size = 0x9000, scoped, tag = 'internal scratch']
  %s0 = inlined_call_operand.vmem [shape: bf16[64,128], index: 0, kind: input, shape index: {}]
  %s1 = inlined_call_operand.hbm [shape: bf16[128,256], index: 1, kind: input, shape index: {}]
  %s2 = inlined_call_operand.vmem [shape: f32[1,256], index: 2, kind: input, shape index: {}]
  %s3 = inlined_call_operand.hbm [shape: bf16[256,128], index: 3, kind: input, shape index: {}]
  %s4 = inlined_call_operand.vmem [shape: f32[1,128], index: 4, kind: input, shape index: {}]
  %s5 = inlined_call_operand.vmem [shape: bf16[128,64], index: 5, kind: input, shape index: {}]
  %s6 = inlined_call_operand.vmem [shape: f32[1,64], index: 6, kind: input, shape index: {}]
  %s7 = inlined_call_operand.hbm [shape: f32[64,64], index: 7, kind: output, shape index: {}]
  %s8 = sld [smem:[#allocation0]]
  $region69: #{tpu_custom_call.1} parent=0
    _
  %s10 = ssub.s32 1, %s8
  %s11 = scalar_select 0, %s10, %s8
  $region1: #{tpu_custom_call.1} parent=0
    #allocation2 [shape = 'u8[65536]{0}', space=vmem, size = 0x10000, scoped, tag = 'input window, operand 1, single buffered']
    #allocation3 [shape = 's32[2]{0}', space=sflag, size = 0x8, scoped, tag = 'scoped memory for tpu_custom_call.1']
    #allocation4 [shape = 's32[2]{0}', space=sflag, size = 0x8, scoped, tag = 'scoped memory for tpu_custom_call.1']
    #allocation5 [shape = 'u8[65536]{0}', space=vmem, size = 0x10000, scoped, tag = 'input window, operand 3, single buffered']
    #allocation6 [shape = 's32[1]{0}', space=sflag, size = 0x4, scoped, tag = 'scoped memory for tpu_custom_call.1']
    #allocation7 [shape = 'u8[32768]{0}', space=vmem, size = 0x8000, scoped, tag = 'output window, operand 0']
    %12 = vsyncpa [#allocation3], 0
    %13 = vsyncpa [#allocation6], 0
    %14 = vsyncpa [#allocation4], 0
    %s15 = scalar_lea.sflag [#allocation4], 1
    %16 = vsyncpa %s15, 0
    loop: start=0, step=1, limit=4
    $region2: #{tpu_custom_call.1} parent=1 // loop_pre_header
      _
    $region3: #{tpu_custom_call.1} parent=1 // loop_header
      %s18 = sphi 0, %s22
      %p19 = scmp.ge.s32.totalorder %s18, 4
      %s28 = sphi 0, %s30
      %s31 = sphi 0, %s28
      %s32 = sphi 0, %s31
      %s48 = sphi 0, %s32
      %s52 = sphi 0, %s52
      %s54 = sphi 0, %s52
      %s55 = sphi 0, %s54
      %s69 = sphi 0, %s55
      %s73 = sphi 0, %s73
      %s75 = sphi 0, %s73
      %s76 = sphi 0, %s75
      %s90 = sphi 0, %s76
      %s94 = sphi 0, %s94
      %s96 = sphi 0, %s94
      %s97 = sphi 0, %s96
      %s111 = sphi 0, %s97
      %s115 = sphi 0, %s115
      %s117 = sphi 0, %s115
      %s118 = sphi 0, %s117
      %s132 = sphi 0, %s118
      %s136 = sphi 0, %s136
      %s138 = sphi 0, %s136
      %s139 = sphi 0, %s138
      %s153 = sphi 0, %s139
      %s157 = sphi 0, %s157
      %s159 = sphi 0, %s157
      %s160 = sphi 0, %s159
      %s174 = sphi 0, %s160
      %s180 = sphi 0, %s182
      %s183 = sphi 0, %s180
      %s184 = sphi 0, %s183
      %s200 = sphi 0, %s184
    $region4: #{tpu_custom_call.1} parent=1 // loop_header_branch
      %21 = sbr.rel (%p19) target = $region8
    $region5: #{tpu_custom_call.1} parent=1 // loop_body
      %s23 = ssub.s32 %s18, 1
      %s24 = ssub.s32 %s18, 2
      %s25 = sadd.s32 %s18, 1
      %s26 = ssub.s32 %s18, %s25
      %p27 = scmp.eq.s32.totalorder %s26, 0
      %s29 = sadd.s32 %s28, 1
      %s30 = scalar_select %p27, %s28, %s29
      %p33 = pneg %p27
      %p34 = scmp.eq.s32.totalorder %s18, 1
      %p35 = por %p33, %p34
      %p36 = scmp.ne.s32.totalorder %s28, %s31
      %p37 = scmp.eq.s32.totalorder %s18, 0
      %p38 = por %p36, %p37
      %p39 = scmp.ne.s32.totalorder %s28, %s31
      %p40 = scmp.eq.s32.totalorder %s23, 1
      %p41 = por %p39, %p40
      %p42 = scmp.ne.s32.totalorder %s31, %s32
      %p43 = scmp.eq.s32.totalorder %s23, 0
      %p44 = por %p42, %p43
      %p45 = scmp.ne.s32.totalorder %s31, %s32
      %p46 = scmp.eq.s32.totalorder %s24, 1
      %p47 = por %p45, %p46
      %p49 = scmp.ne.s32.totalorder %s32, %s48
      %p50 = scmp.eq.s32.totalorder %s24, 0
      %p51 = por %p49, %p50
      %s53 = sadd.s32 %s52, 1
      %p56 = scmp.eq.s32.totalorder %s18, 1
      %p57 = scmp.ne.s32.totalorder %s52, %s54
      %p58 = scmp.eq.s32.totalorder %s18, 0
      %p59 = por %p57, %p58
      %p60 = scmp.ne.s32.totalorder %s52, %s54
      %p61 = scmp.eq.s32.totalorder %s23, 1
      %p62 = por %p60, %p61
      %p63 = scmp.ne.s32.totalorder %s54, %s55
      %p64 = scmp.eq.s32.totalorder %s23, 0
      %p65 = por %p63, %p64
      %p66 = scmp.ne.s32.totalorder %s54, %s55
      %p67 = scmp.eq.s32.totalorder %s24, 1
      %p68 = por %p66, %p67
      %p70 = scmp.ne.s32.totalorder %s55, %s69
      %p71 = scmp.eq.s32.totalorder %s24, 0
      %p72 = por %p70, %p71
      %s74 = sadd.s32 %s73, 1
      %p77 = scmp.eq.s32.totalorder %s18, 1
      %p78 = scmp.ne.s32.totalorder %s73, %s75
      %p79 = scmp.eq.s32.totalorder %s18, 0
      %p80 = por %p78, %p79
      %p81 = scmp.ne.s32.totalorder %s73, %s75
      %p82 = scmp.eq.s32.totalorder %s23, 1
      %p83 = por %p81, %p82
      %p84 = scmp.ne.s32.totalorder %s75, %s76
      %p85 = scmp.eq.s32.totalorder %s23, 0
      %p86 = por %p84, %p85
      %p87 = scmp.ne.s32.totalorder %s75, %s76
      %p88 = scmp.eq.s32.totalorder %s24, 1
      %p89 = por %p87, %p88
      %p91 = scmp.ne.s32.totalorder %s76, %s90
      %p92 = scmp.eq.s32.totalorder %s24, 0
      %p93 = por %p91, %p92
      %s95 = sadd.s32 %s94, 1
      %p98 = scmp.eq.s32.totalorder %s18, 1
      %p99 = scmp.ne.s32.totalorder %s94, %s96
      %p100 = scmp.eq.s32.totalorder %s18, 0
      %p101 = por %p99, %p100
      %p102 = scmp.ne.s32.totalorder %s94, %s96
      %p103 = scmp.eq.s32.totalorder %s23, 1
      %p104 = por %p102, %p103
      %p105 = scmp.ne.s32.totalorder %s96, %s97
      %p106 = scmp.eq.s32.totalorder %s23, 0
      %p107 = por %p105, %p106
      %p108 = scmp.ne.s32.totalorder %s96, %s97
      %p109 = scmp.eq.s32.totalorder %s24, 1
      %p110 = por %p108, %p109
      %p112 = scmp.ne.s32.totalorder %s97, %s111
      %p113 = scmp.eq.s32.totalorder %s24, 0
      %p114 = por %p112, %p113
      %s116 = sadd.s32 %s115, 1
      %p119 = scmp.eq.s32.totalorder %s18, 1
      %p120 = scmp.ne.s32.totalorder %s115, %s117
      %p121 = scmp.eq.s32.totalorder %s18, 0
      %p122 = por %p120, %p121
      %p123 = scmp.ne.s32.totalorder %s115, %s117
      %p124 = scmp.eq.s32.totalorder %s23, 1
      %p125 = por %p123, %p124
      %p126 = scmp.ne.s32.totalorder %s117, %s118
      %p127 = scmp.eq.s32.totalorder %s23, 0
      %p128 = por %p126, %p127
      %p129 = scmp.ne.s32.totalorder %s117, %s118
      %p130 = scmp.eq.s32.totalorder %s24, 1
      %p131 = por %p129, %p130
      %p133 = scmp.ne.s32.totalorder %s118, %s132
      %p134 = scmp.eq.s32.totalorder %s24, 0
      %p135 = por %p133, %p134
      %s137 = sadd.s32 %s136, 1
      %p140 = scmp.eq.s32.totalorder %s18, 1
      %p141 = scmp.ne.s32.totalorder %s136, %s138
      %p142 = scmp.eq.s32.totalorder %s18, 0
      %p143 = por %p141, %p142
      %p144 = scmp.ne.s32.totalorder %s136, %s138
      %p145 = scmp.eq.s32.totalorder %s23, 1
      %p146 = por %p144, %p145
      %p147 = scmp.ne.s32.totalorder %s138, %s139
      %p148 = scmp.eq.s32.totalorder %s23, 0
      %p149 = por %p147, %p148
      %p150 = scmp.ne.s32.totalorder %s138, %s139
      %p151 = scmp.eq.s32.totalorder %s24, 1
      %p152 = por %p150, %p151
      %p154 = scmp.ne.s32.totalorder %s139, %s153
      %p155 = scmp.eq.s32.totalorder %s24, 0
      %p156 = por %p154, %p155
      %s158 = sadd.s32 %s157, 1
      %p161 = scmp.eq.s32.totalorder %s18, 1
      %p162 = scmp.ne.s32.totalorder %s157, %s159
      %p163 = scmp.eq.s32.totalorder %s18, 0
      %p164 = por %p162, %p163
      %p165 = scmp.ne.s32.totalorder %s157, %s159
      %p166 = scmp.eq.s32.totalorder %s23, 1
      %p167 = por %p165, %p166
      %p168 = scmp.ne.s32.totalorder %s159, %s160
      %p169 = scmp.eq.s32.totalorder %s23, 0
      %p170 = por %p168, %p169
      %p171 = scmp.ne.s32.totalorder %s159, %s160
      %p172 = scmp.eq.s32.totalorder %s24, 1
      %p173 = por %p171, %p172
      %p175 = scmp.ne.s32.totalorder %s160, %s174
      %p176 = scmp.eq.s32.totalorder %s24, 0
      %p177 = por %p175, %p176
      %s178 = ssub.s32 %s18, %s25
      %p179 = scmp.eq.s32.totalorder %s178, 0
      %s181 = sadd.s32 %s180, 1
      %s182 = scalar_select %p179, %s180, %s181
      %p185 = pneg %p179
      %p186 = scmp.eq.s32.totalorder %s18, 1
      %p187 = por %p185, %p186
      %p188 = scmp.ne.s32.totalorder %s180, %s183
      %p189 = scmp.eq.s32.totalorder %s18, 0
      %p190 = por %p188, %p189
      %p191 = scmp.ne.s32.totalorder %s180, %s183
      %p192 = scmp.eq.s32.totalorder %s23, 1
      %p193 = por %p191, %p192
      %p194 = scmp.ne.s32.totalorder %s183, %s184
      %p195 = scmp.eq.s32.totalorder %s23, 0
      %p196 = por %p194, %p195
      %p197 = scmp.ne.s32.totalorder %s183, %s184
      %p198 = scmp.eq.s32.totalorder %s24, 1
      %p199 = por %p197, %p198
      %p201 = scmp.ne.s32.totalorder %s184, %s200
      %p202 = scmp.eq.s32.totalorder %s24, 0
      %p203 = por %p201, %p202
      %p204 = scmp.le.s32.totalorder 1, %s18
      %p205 = scmp.lt.s32.totalorder %s18, 3
      %p206 = pnand %p204, %p205
      %p207 = pneg %p206
      // Predicated region
      $region9: #{tpu_custom_call.1} parent=5 // pred_check
        _
      $region10: #{tpu_custom_call.1} parent=5 // pred_check_branch
        %209 = sbr.rel (%p206) target = $region12
      $region11: #{tpu_custom_call.1} parent=5 // pred_region
        %s210 = ssub.s32 %s18, 1
        // Predicated region
        $region13: #{tpu_custom_call.1} parent=11 // pred_check
          %p211 = pneg %p65
        $region14: #{tpu_custom_call.1} parent=11 // pred_check_branch
          %213 = sbr.rel (%p211) target = $region16
        $region15: #{tpu_custom_call.1} parent=11 // pred_region
          %215 = vsyncadd [#allocation3], 0
          %s216 = sshll.u32 %s1, 4
          %s217 = int_to_ptr.hbm [resolvable:$true] %s216
          %s218 = sshll.u32 [#allocation2], 4
          %s219 = int_to_ptr.vmem [resolvable:$true] %s218
          %224 = dma.hbm_to_vmem [thread:$0]  %s217, 2048, %s219, [#allocation3], 128, 128, 8
        $region16: #{tpu_custom_call.1} parent=11 // pred_fallthru
          _
        // Predicated region
        $region17: #{tpu_custom_call.1} parent=11 // pred_check
          %p225 = pneg %p86
        $region18: #{tpu_custom_call.1} parent=11 // pred_check_branch
          %227 = sbr.rel (%p225) target = $region20
        $region19: #{tpu_custom_call.1} parent=11 // pred_region
          _
        $region20: #{tpu_custom_call.1} parent=11 // pred_fallthru
          _
        // Predicated region
        $region21: #{tpu_custom_call.1} parent=11 // pred_check
          %p228 = pneg %p107
        $region22: #{tpu_custom_call.1} parent=11 // pred_check_branch
          %230 = sbr.rel (%p228) target = $region24
        $region23: #{tpu_custom_call.1} parent=11 // pred_region
          %232 = vsyncadd [#allocation6], 0
          %s233 = sshll.u32 %s3, 4
          %s234 = int_to_ptr.hbm [resolvable:$true] %s233
          %s235 = sshll.u32 [#allocation5], 4
          %s236 = int_to_ptr.vmem [resolvable:$true] %s235
          %241 = dma.hbm_to_vmem [thread:$0]  %s234, 2048, %s236, [#allocation6], 64, 64, 4
        $region24: #{tpu_custom_call.1} parent=11 // pred_fallthru
          _
        // Predicated region
        $region25: #{tpu_custom_call.1} parent=11 // pred_check
          %p242 = pneg %p128
        $region26: #{tpu_custom_call.1} parent=11 // pred_check_branch
          %244 = sbr.rel (%p242) target = $region28
        $region27: #{tpu_custom_call.1} parent=11 // pred_region
          _
        $region28: #{tpu_custom_call.1} parent=11 // pred_fallthru
          _
        // Predicated region
        $region29: #{tpu_custom_call.1} parent=11 // pred_check
          %p245 = pneg %p149
        $region30: #{tpu_custom_call.1} parent=11 // pred_check_branch
          %247 = sbr.rel (%p245) target = $region32
        $region31: #{tpu_custom_call.1} parent=11 // pred_region
          _
        $region32: #{tpu_custom_call.1} parent=11 // pred_fallthru
          _
        // Predicated region
        $region33: #{tpu_custom_call.1} parent=11 // pred_check
          %p248 = pneg %p170
        $region34: #{tpu_custom_call.1} parent=11 // pred_check_branch
          %250 = sbr.rel (%p248) target = $region36
        $region35: #{tpu_custom_call.1} parent=11 // pred_region
          _
        $region36: #{tpu_custom_call.1} parent=11 // pred_fallthru
          _
      $region12: #{tpu_custom_call.1} parent=5 // pred_fallthru
        _
      %p251 = scmp.lt.s32.totalorder %s18, 2
      // Predicated region
      $region37: #{tpu_custom_call.1} parent=5 // pred_check
        %p252 = pneg %p251
      $region38: #{tpu_custom_call.1} parent=5 // pred_check_branch
        %254 = sbr.rel (%p252) target = $region40
      $region39: #{tpu_custom_call.1} parent=5 // pred_region
        // Predicated region
        $region41: #{tpu_custom_call.1} parent=39 // pred_check
          %p255 = pneg %p38
        $region42: #{tpu_custom_call.1} parent=39 // pred_check_branch
          %257 = sbr.rel (%p255) target = $region44
        $region43: #{tpu_custom_call.1} parent=39 // pred_region
          %s258 = smul.u32 4, %s18
          %p259 = scmp.lt.s32.totalorder %s258, 7
          %s260 = scalar_select %p259, %s258, 7
          %s261 = smul.addr %s260, 4
          %s262 = scalar_lea.vmem %s0, %s261
          %s263 = smul.u32 4, %s18
        $region44: #{tpu_custom_call.1} parent=39 // pred_fallthru
          _
      $region40: #{tpu_custom_call.1} parent=5 // pred_fallthru
        _
      %p264 = scmp.le.s32.totalorder 1, %s18
      %p265 = scmp.lt.s32.totalorder %s18, 3
      %p266 = pnand %p264, %p265
      %p267 = pneg %p266
      // Predicated region
      $region45: #{tpu_custom_call.1} parent=5 // pred_check
        _
      $region46: #{tpu_custom_call.1} parent=5 // pred_check_branch
        %269 = sbr.rel (%p266) target = $region48
      $region47: #{tpu_custom_call.1} parent=5 // pred_region
        %s270 = ssub.s32 %s18, 1
        // Predicated region
        $region49: #{tpu_custom_call.1} parent=47 // pred_check
          %p271 = pneg %p65
        $region50: #{tpu_custom_call.1} parent=47 // pred_check_branch
          %273 = sbr.rel (%p271) target = $region52
        $region51: #{tpu_custom_call.1} parent=47 // pred_region
          %275 = dma.done [#allocation3], 2048
        $region52: #{tpu_custom_call.1} parent=47 // pred_fallthru
          _
        // Predicated region
        $region53: #{tpu_custom_call.1} parent=47 // pred_check
          %p276 = pneg %p107
        $region54: #{tpu_custom_call.1} parent=47 // pred_check_branch
          %278 = sbr.rel (%p276) target = $region56
        $region55: #{tpu_custom_call.1} parent=47 // pred_region
          %280 = dma.done [#allocation6], 2048
        $region56: #{tpu_custom_call.1} parent=47 // pred_fallthru
          _
        %s281 = smul.u32 4, %s23
        %p282 = scmp.lt.s32.totalorder %s281, 7
        %s283 = scalar_select %p282, %s281, 7
        %s284 = smul.addr %s283, 4
        %s285 = scalar_lea.vmem %s0, %s284
        %p286 = pneg %p44
        %p287 = pneg %p41
        %p288 = pneg %p65
        %p289 = pneg %p62
        %p290 = pneg %p86
        %p291 = pneg %p83
        %p292 = pneg %p107
        %p293 = pneg %p104
        %p294 = pneg %p128
        %p295 = pneg %p125
        %p296 = pneg %p149
        %p297 = pneg %p146
        %p298 = pneg %p170
        %p299 = pneg %p167
        %p300 = pneg %p196
        %p301 = pneg %p193
        %s302 = sand.u32 %s183, 1
        %s303 = scalar_lea.sflag [#allocation4], %s302
        %s304 = sand.u32 %s183, 1
        %s305 = smul.addr %s304, 32
        %s306 = scalar_lea.vmem [#allocation7], %s305
        %s307 = smul.u32 4, %s23
        %p308 = scmp.lt.s32.totalorder %s307, 7
        %s309 = scalar_select %p308, %s307, 7
        %s310 = smul.addr %s309, 4
        %s311 = scalar_lea.vmem %s0, %s310
        %s312 = smul.u32 4, %s23
        %s313 = smul.u32 4, %s23
        %v314 = vld [vmem:[%s311] sm:$0xf]
        %v315 = vld [vmem:[%s311 + $0x4] sm:$0xf]
        %v316 = vld [vmem:[%s311 + $0x8] sm:$0xf]
        %v317 = vld [vmem:[%s311 + $0xc] sm:$0xf]
        %v318 = vld [vmem:[#allocation2] sm:$0xff]
        %v319 = vld [vmem:[#allocation2 + $0x8] sm:$0xff]
        %v320 = vld [vmem:[#allocation2 + $0x10] sm:$0xff]
        %v321 = vld [vmem:[#allocation2 + $0x18] sm:$0xff]
        %v322 = vld [vmem:[#allocation2 + $0x20] sm:$0xff]
        %v323 = vld [vmem:[#allocation2 + $0x28] sm:$0xff]
        %v324 = vld [vmem:[#allocation2 + $0x30] sm:$0xff]
        %v325 = vld [vmem:[#allocation2 + $0x38] sm:$0xff]
        %v326 = vld [vmem:[#allocation2 + $0x40] sm:$0xff]
        %v327 = vld [vmem:[#allocation2 + $0x48] sm:$0xff]
        %v328 = vld [vmem:[#allocation2 + $0x50] sm:$0xff]
        %v329 = vld [vmem:[#allocation2 + $0x58] sm:$0xff]
        %v330 = vld [vmem:[#allocation2 + $0x60] sm:$0xff]
        %v331 = vld [vmem:[#allocation2 + $0x68] sm:$0xff]
        %v332 = vld [vmem:[#allocation2 + $0x70] sm:$0xff]
        %v333 = vld [vmem:[#allocation2 + $0x78] sm:$0xff]
        %v334 = vld [vmem:[%s2] sm:$0x3]
        %v336 = vperm.slane %v334, 0
        %v337 = vperm.slane %v334, 1
        %v344 = vunpack.c.l.b16 %v314
        %v345 = vunpack.c.l.b16 %v315
        %v346 = vunpack.c.l.b16 %v316
        %v347 = vunpack.c.l.b16 %v317
        %v348 = vpack.c.b16 %v345, %v344
        %v349 = vpack.c.b16 %v347, %v346
        %v368 = vunpack.c.l.b16 %v318
        %v369 = vunpack.c.h.b16 %v318
        %v370 = vunpack.c.l.b16 %v319
        %v371 = vunpack.c.h.b16 %v319
        %v372 = vunpack.c.l.b16 %v320
        %v373 = vunpack.c.h.b16 %v320
        %v374 = vunpack.c.l.b16 %v321
        %v375 = vunpack.c.h.b16 %v321
        %v376 = vunpack.c.l.b16 %v322
        %v377 = vunpack.c.h.b16 %v322
        %v378 = vunpack.c.l.b16 %v323
        %v379 = vunpack.c.h.b16 %v323
        %v380 = vunpack.c.l.b16 %v324
        %v381 = vunpack.c.h.b16 %v324
        %v382 = vunpack.c.l.b16 %v325
        %v383 = vunpack.c.h.b16 %v325
        %v384 = vunpack.c.l.b16 %v326
        %v385 = vunpack.c.h.b16 %v326
        %v386 = vunpack.c.l.b16 %v327
        %v387 = vunpack.c.h.b16 %v327
        %v388 = vunpack.c.l.b16 %v328
        %v389 = vunpack.c.h.b16 %v328
        %v390 = vunpack.c.l.b16 %v329
        %v391 = vunpack.c.h.b16 %v329
        %v392 = vunpack.c.l.b16 %v330
        %v393 = vunpack.c.h.b16 %v330
        %v394 = vunpack.c.l.b16 %v331
        %v395 = vunpack.c.h.b16 %v331
        %v396 = vunpack.c.l.b16 %v332
        %v397 = vunpack.c.h.b16 %v332
        %v398 = vunpack.c.l.b16 %v333
        %v399 = vunpack.c.h.b16 %v333
        %v400 = vpack.c.b16 %v370, %v368
        %v401 = vpack.c.b16 %v371, %v369
        %v402 = vpack.c.b16 %v374, %v372
        %v403 = vpack.c.b16 %v375, %v373
        %v404 = vpack.c.b16 %v378, %v376
        %v405 = vpack.c.b16 %v379, %v377
        %v406 = vpack.c.b16 %v382, %v380
        %v407 = vpack.c.b16 %v383, %v381
        %v408 = vpack.c.b16 %v386, %v384
        %v409 = vpack.c.b16 %v387, %v385
        %v410 = vpack.c.b16 %v390, %v388
        %v411 = vpack.c.b16 %v391, %v389
        %v412 = vpack.c.b16 %v394, %v392
        %v413 = vpack.c.b16 %v395, %v393
        %v414 = vpack.c.b16 %v398, %v396
        %v415 = vpack.c.b16 %v399, %v397
        %432 = vmatpush.bf16.msra.mxu0 %v414
        %433 = vmatpush.bf16.msra.mxu0 %v412
        %434 = vmatpush.bf16.msra.mxu0 %v410
        %435 = vmatpush.bf16.msra.mxu0 %v408
        %436 = vmatpush.bf16.msra.mxu0 %v406
        %437 = vmatpush.bf16.msra.mxu0 %v404
        %438 = vmatpush.bf16.msra.mxu0 %v402
        %439 = vmatpush.bf16.msra.mxu0 %v400
        %440 = vmatmul.bf16.gmra.mxu0 %v348
        %v441 = vpop.f32.mrf.mxu0
        %v442 = vadd.f32 %v336, %v441
        %v443 = vpop.f32.mrf.mxu0
        %v444 = vadd.f32 %v336, %v443
        %445 = vmatmul.bf16.gmra.mxu0 %v349
        %v446 = vpop.f32.mrf.mxu0
        %v447 = vadd.f32 %v336, %v446
        %v448 = vpop.f32.mrf.mxu0
        %v449 = vadd.f32 %v336, %v448
        %450 = vdwg.mxu0
        %451 = vmatpush.bf16.msra.mxu0 %v415
        %452 = vmatpush.bf16.msra.mxu0 %v413
        %453 = vmatpush.bf16.msra.mxu0 %v411
        %454 = vmatpush.bf16.msra.mxu0 %v409
        %455 = vmatpush.bf16.msra.mxu0 %v407
        %456 = vmatpush.bf16.msra.mxu0 %v405
        %457 = vmatpush.bf16.msra.mxu0 %v403
        %458 = vmatpush.bf16.msra.mxu0 %v401
        %459 = vmatmul.bf16.gmra.mxu0 %v348
        %v460 = vpop.f32.mrf.mxu0
        %v461 = vadd.f32 %v337, %v460
        %v462 = vpop.f32.mrf.mxu0
        %v463 = vadd.f32 %v337, %v462
        %464 = vmatmul.bf16.gmra.mxu0 %v349
        %v465 = vpop.f32.mrf.mxu0
        %v466 = vadd.f32 %v337, %v465
        %v467 = vpop.f32.mrf.mxu0
        %v468 = vadd.f32 %v337, %v467
        %469 = vdwg.mxu0
        %v470 = vmax.f32 %v442, 0.0
        %v471 = vmax.f32 %v461, 0.0
        %v472 = vmax.f32 %v444, 0.0
        %v473 = vmax.f32 %v463, 0.0
        %v474 = vmax.f32 %v447, 0.0
        %v475 = vmax.f32 %v466, 0.0
        %v476 = vmax.f32 %v449, 0.0
        %v477 = vmax.f32 %v468, 0.0
        %v478 = vpack.c.bf16 %v472, %v470
        %v479 = vpack.c.bf16 %v473, %v471
        %v480 = vpack.c.bf16 %v476, %v474
        %v481 = vpack.c.bf16 %v477, %v475
        %v482 = vld [vmem:[#allocation5] sm:$0xf]
        %v483 = vld [vmem:[#allocation5 + $0x4] sm:$0xf]
        %v484 = vld [vmem:[#allocation5 + $0x8] sm:$0xf]
        %v485 = vld [vmem:[#allocation5 + $0xc] sm:$0xf]
        %v486 = vld [vmem:[#allocation5 + $0x10] sm:$0xf]
        %v487 = vld [vmem:[#allocation5 + $0x14] sm:$0xf]
        %v488 = vld [vmem:[#allocation5 + $0x18] sm:$0xf]
        %v489 = vld [vmem:[#allocation5 + $0x1c] sm:$0xf]
        %v490 = vld [vmem:[#allocation5 + $0x20] sm:$0xf]
        %v491 = vld [vmem:[#allocation5 + $0x24] sm:$0xf]
        %v492 = vld [vmem:[#allocation5 + $0x28] sm:$0xf]
        %v493 = vld [vmem:[#allocation5 + $0x2c] sm:$0xf]
        %v494 = vld [vmem:[#allocation5 + $0x30] sm:$0xf]
        %v495 = vld [vmem:[#allocation5 + $0x34] sm:$0xf]
        %v496 = vld [vmem:[#allocation5 + $0x38] sm:$0xf]
        %v497 = vld [vmem:[#allocation5 + $0x3c] sm:$0xf]
        %v498 = vld [vmem:[#allocation5 + $0x40] sm:$0xf]
        %v499 = vld [vmem:[#allocation5 + $0x44] sm:$0xf]
        %v500 = vld [vmem:[#allocation5 + $0x48] sm:$0xf]
        %v501 = vld [vmem:[#allocation5 + $0x4c] sm:$0xf]
        %v502 = vld [vmem:[#allocation5 + $0x50] sm:$0xf]
        %v503 = vld [vmem:[#allocation5 + $0x54] sm:$0xf]
        %v504 = vld [vmem:[#allocation5 + $0x58] sm:$0xf]
        %v505 = vld [vmem:[#allocation5 + $0x5c] sm:$0xf]
        %v506 = vld [vmem:[#allocation5 + $0x60] sm:$0xf]
        %v507 = vld [vmem:[#allocation5 + $0x64] sm:$0xf]
        %v508 = vld [vmem:[#allocation5 + $0x68] sm:$0xf]
        %v509 = vld [vmem:[#allocation5 + $0x6c] sm:$0xf]
        %v510 = vld [vmem:[#allocation5 + $0x70] sm:$0xf]
        %v511 = vld [vmem:[#allocation5 + $0x74] sm:$0xf]
        %v512 = vld [vmem:[#allocation5 + $0x78] sm:$0xf]
        %v513 = vld [vmem:[#allocation5 + $0x7c] sm:$0xf]
        %v514 = vld [vmem:[%s4] sm:$0x1]
        %v516 = vperm.slane %v514, 0
        %v550 = vunpack.c.l.b16 %v482
        %v551 = vunpack.c.l.b16 %v483
        %v552 = vunpack.c.l.b16 %v484
        %v553 = vunpack.c.l.b16 %v485
        %v554 = vunpack.c.l.b16 %v486
        %v555 = vunpack.c.l.b16 %v487
        %v556 = vunpack.c.l.b16 %v488
        %v557 = vunpack.c.l.b16 %v489
        %v558 = vunpack.c.l.b16 %v490
        %v559 = vunpack.c.l.b16 %v491
        %v560 = vunpack.c.l.b16 %v492
        %v561 = vunpack.c.l.b16 %v493
        %v562 = vunpack.c.l.b16 %v494
        %v563 = vunpack.c.l.b16 %v495
        %v564 = vunpack.c.l.b16 %v496
        %v565 = vunpack.c.l.b16 %v497
        %v566 = vunpack.c.l.b16 %v498
        %v567 = vunpack.c.l.b16 %v499
        %v568 = vunpack.c.l.b16 %v500
        %v569 = vunpack.c.l.b16 %v501
        %v570 = vunpack.c.l.b16 %v502
        %v571 = vunpack.c.l.b16 %v503
        %v572 = vunpack.c.l.b16 %v504
        %v573 = vunpack.c.l.b16 %v505
        %v574 = vunpack.c.l.b16 %v506
        %v575 = vunpack.c.l.b16 %v507
        %v576 = vunpack.c.l.b16 %v508
        %v577 = vunpack.c.l.b16 %v509
        %v578 = vunpack.c.l.b16 %v510
        %v579 = vunpack.c.l.b16 %v511
        %v580 = vunpack.c.l.b16 %v512
        %v581 = vunpack.c.l.b16 %v513
        %v582 = vpack.c.b16 %v551, %v550
        %v583 = vpack.c.b16 %v553, %v552
        %v584 = vpack.c.b16 %v555, %v554
        %v585 = vpack.c.b16 %v557, %v556
        %v586 = vpack.c.b16 %v559, %v558
        %v587 = vpack.c.b16 %v561, %v560
        %v588 = vpack.c.b16 %v563, %v562
        %v589 = vpack.c.b16 %v565, %v564
        %v590 = vpack.c.b16 %v567, %v566
        %v591 = vpack.c.b16 %v569, %v568
        %v592 = vpack.c.b16 %v571, %v570
        %v593 = vpack.c.b16 %v573, %v572
        %v594 = vpack.c.b16 %v575, %v574
        %v595 = vpack.c.b16 %v577, %v576
        %v596 = vpack.c.b16 %v579, %v578
        %v597 = vpack.c.b16 %v581, %v580
        %614 = vmatpush.bf16.msra.mxu0 %v589
        %615 = vmatpush.bf16.msra.mxu0 %v588
        %616 = vmatpush.bf16.msra.mxu0 %v587
        %617 = vmatpush.bf16.msra.mxu0 %v586
        %618 = vmatpush.bf16.msra.mxu0 %v585
        %619 = vmatpush.bf16.msra.mxu0 %v584
        %620 = vmatpush.bf16.msra.mxu0 %v583
        %621 = vmatpush.bf16.msra.mxu0 %v582
        %622 = vmatmul.bf16.gmra.mxu0 %v478
        %v623 = vpop.f32.mrf.mxu0
        %v624 = vadd.f32 %v516, %v623
        %v625 = vpop.f32.mrf.mxu0
        %v626 = vadd.f32 %v516, %v625
        %627 = vmatmul.bf16.gmra.mxu0 %v480
        %v628 = vpop.f32.mrf.mxu0
        %v629 = vadd.f32 %v516, %v628
        %v630 = vpop.f32.mrf.mxu0
        %v631 = vadd.f32 %v516, %v630
        %632 = vdwg.mxu0
        %633 = vmatpush.bf16.msra.mxu0 %v597
        %634 = vmatpush.bf16.msra.mxu0 %v596
        %635 = vmatpush.bf16.msra.mxu0 %v595
        %636 = vmatpush.bf16.msra.mxu0 %v594
        %637 = vmatpush.bf16.msra.mxu0 %v593
        %638 = vmatpush.bf16.msra.mxu0 %v592
        %639 = vmatpush.bf16.msra.mxu0 %v591
        %640 = vmatpush.bf16.msra.mxu0 %v590
        %641 = vmatmul.bf16.gmra.mxu0 %v479
        %v642 = vpop.f32.mrf.mxu0
        %v643 = vadd.f32 %v624, %v642
        %v644 = vpop.f32.mrf.mxu0
        %v645 = vadd.f32 %v626, %v644
        %646 = vmatmul.bf16.gmra.mxu0 %v481
        %v647 = vpop.f32.mrf.mxu0
        %v648 = vadd.f32 %v629, %v647
        %v649 = vpop.f32.mrf.mxu0
        %v650 = vadd.f32 %v631, %v649
        %651 = vdwg.mxu0
        %v652 = vmax.f32 %v643, 0.0
        %v653 = vmax.f32 %v645, 0.0
        %v654 = vmax.f32 %v648, 0.0
        %v655 = vmax.f32 %v650, 0.0
        %v656 = vpack.c.bf16 %v653, %v652
        %v657 = vpack.c.bf16 %v655, %v654
        %v658 = vld [vmem:[%s5] sm:$0xf]
        %v659 = vld [vmem:[%s5 + $0x4] sm:$0xf]
        %v660 = vld [vmem:[%s5 + $0x8] sm:$0xf]
        %v661 = vld [vmem:[%s5 + $0xc] sm:$0xf]
        %v662 = vld [vmem:[%s5 + $0x10] sm:$0xf]
        %v663 = vld [vmem:[%s5 + $0x14] sm:$0xf]
        %v664 = vld [vmem:[%s5 + $0x18] sm:$0xf]
        %v665 = vld [vmem:[%s5 + $0x1c] sm:$0xf]
        %v666 = vld [vmem:[%s5 + $0x20] sm:$0xf]
        %v667 = vld [vmem:[%s5 + $0x24] sm:$0xf]
        %v668 = vld [vmem:[%s5 + $0x28] sm:$0xf]
        %v669 = vld [vmem:[%s5 + $0x2c] sm:$0xf]
        %v670 = vld [vmem:[%s5 + $0x30] sm:$0xf]
        %v671 = vld [vmem:[%s5 + $0x34] sm:$0xf]
        %v672 = vld [vmem:[%s5 + $0x38] sm:$0xf]
        %v673 = vld [vmem:[%s5 + $0x3c] sm:$0xf]
        %v674 = vld [vmem:[%s6] sm:$0x1]
        %v676 = vperm.slane %v674, 0
        %v694 = vunpack.c.l.b16 %v658
        %v695 = vunpack.c.l.b16 %v659
        %v696 = vunpack.c.l.b16 %v660
        %v697 = vunpack.c.l.b16 %v661
        %v698 = vunpack.c.l.b16 %v662
        %v699 = vunpack.c.l.b16 %v663
        %v700 = vunpack.c.l.b16 %v664
        %v701 = vunpack.c.l.b16 %v665
        %v702 = vunpack.c.l.b16 %v666
        %v703 = vunpack.c.l.b16 %v667
        %v704 = vunpack.c.l.b16 %v668
        %v705 = vunpack.c.l.b16 %v669
        %v706 = vunpack.c.l.b16 %v670
        %v707 = vunpack.c.l.b16 %v671
        %v708 = vunpack.c.l.b16 %v672
        %v709 = vunpack.c.l.b16 %v673
        %v710 = vpack.c.b16 %v695, %v694
        %v711 = vpack.c.b16 %v697, %v696
        %v712 = vpack.c.b16 %v699, %v698
        %v713 = vpack.c.b16 %v701, %v700
        %v714 = vpack.c.b16 %v703, %v702
        %v715 = vpack.c.b16 %v705, %v704
        %v716 = vpack.c.b16 %v707, %v706
        %v717 = vpack.c.b16 %v709, %v708
        %726 = vmatpush.bf16.msra.mxu0 %v717
        %727 = vmatpush.bf16.msra.mxu0 %v716
        %728 = vmatpush.bf16.msra.mxu0 %v715
        %729 = vmatpush.bf16.msra.mxu0 %v714
        %730 = vmatpush.bf16.msra.mxu0 %v713
        %731 = vmatpush.bf16.msra.mxu0 %v712
        %732 = vmatpush.bf16.msra.mxu0 %v711
        %733 = vmatpush.bf16.msra.mxu0 %v710
        %734 = vmatmul.bf16.gmra.mxu0 %v656
        %v735 = vpop.f32.mrf.mxu0
        %v736 = vadd.f32 %v676, %v735
        %v737 = vpop.f32.mrf.mxu0
        %v738 = vadd.f32 %v676, %v737
        %739 = vmatmul.bf16.gmra.mxu0 %v657
        %v740 = vpop.f32.mrf.mxu0
        %v741 = vadd.f32 %v676, %v740
        %v742 = vpop.f32.mrf.mxu0
        %v743 = vadd.f32 %v676, %v742
        %744 = vdwg.mxu0
        %v745 = vxor.u32 %v736, 2147483648
        %v746 = vxor.u32 %v738, 2147483648
        %v747 = vxor.u32 %v741, 2147483648
        %v748 = vxor.u32 %v743, 2147483648
        %v749 = vmul.f32 %v745, 1.442695
        %v750 = vpow.pop %v749
        %v751 = vmul.f32 %v746, 1.442695
        %v752 = vpow.pop %v751
        %v753 = vmul.f32 %v747, 1.442695
        %v754 = vpow.pop %v753
        %v755 = vmul.f32 %v748, 1.442695
        %v756 = vpow.pop %v755
        %v757 = vadd.f32 %v750, 1.0
        %v758 = vadd.f32 %v752, 1.0
        %v759 = vadd.f32 %v754, 1.0
        %v760 = vadd.f32 %v756, 1.0
        %v761 = vrcp.pop %v757
        %v762 = vmul.f32 %v757, %v761
        %v763 = vsub.f32 1.0, %v762
        %v764 = vmul.f32 %v761, %v763
        %v765 = vadd.f32 %v761, %v764
        %vm766 = vweird.f32 %v757
        %vm767 = vweird.f32 %v761
        %vm768 = vmor %vm766, %vm767
        %v769 = vsel %vm768, %v761, %v765
        %v770 = vand.u32 2147483647, %v757
        %vm771 = vcmp.eq.f32.partialorder %v770, 8.507059e+37
        %v772 = vand.u32 %v757, 2147483648
        %v773 = vor.u32 1.1754944e-38, %v772
        %v774 = vsel %vm771, %v773, %v769
        %v775 = vmul.f32 1.0, %v774
        %v776 = vrcp.pop %v758
        %v777 = vmul.f32 %v758, %v776
        %v778 = vsub.f32 1.0, %v777
        %v779 = vmul.f32 %v776, %v778
        %v780 = vadd.f32 %v776, %v779
        %vm781 = vweird.f32 %v758
        %vm782 = vweird.f32 %v776
        %vm783 = vmor %vm781, %vm782
        %v784 = vsel %vm783, %v776, %v780
        %v785 = vand.u32 2147483647, %v758
        %vm786 = vcmp.eq.f32.partialorder %v785, 8.507059e+37
        %v787 = vand.u32 %v758, 2147483648
        %v788 = vor.u32 1.1754944e-38, %v787
        %v789 = vsel %vm786, %v788, %v784
        %v790 = vmul.f32 1.0, %v789
        %v791 = vrcp.pop %v759
        %v792 = vmul.f32 %v759, %v791
        %v793 = vsub.f32 1.0, %v792
        %v794 = vmul.f32 %v791, %v793
        %v795 = vadd.f32 %v791, %v794
        %vm796 = vweird.f32 %v759
        %vm797 = vweird.f32 %v791
        %vm798 = vmor %vm796, %vm797
        %v799 = vsel %vm798, %v791, %v795
        %v800 = vand.u32 2147483647, %v759
        %vm801 = vcmp.eq.f32.partialorder %v800, 8.507059e+37
        %v802 = vand.u32 %v759, 2147483648
        %v803 = vor.u32 1.1754944e-38, %v802
        %v804 = vsel %vm801, %v803, %v799
        %v805 = vmul.f32 1.0, %v804
        %v806 = vrcp.pop %v760
        %v807 = vmul.f32 %v760, %v806
        %v808 = vsub.f32 1.0, %v807
        %v809 = vmul.f32 %v806, %v808
        %v810 = vadd.f32 %v806, %v809
        %vm811 = vweird.f32 %v760
        %vm812 = vweird.f32 %v806
        %vm813 = vmor %vm811, %vm812
        %v814 = vsel %vm813, %v806, %v810
        %v815 = vand.u32 2147483647, %v760
        %vm816 = vcmp.eq.f32.partialorder %v815, 8.507059e+37
        %v817 = vand.u32 %v760, 2147483648
        %v818 = vor.u32 1.1754944e-38, %v817
        %v819 = vsel %vm816, %v818, %v814
        %v820 = vmul.f32 1.0, %v819
        %vm821 = vcmask 523264
        %822 = vst.msk [vmem:[%s306] sm:$0xff] %vm821, %v775
        %823 = vst.msk [vmem:[%s306 + $0x8] sm:$0xff] %vm821, %v790
        %824 = vst.msk [vmem:[%s306 + $0x10] sm:$0xff] %vm821, %v805
        %825 = vst.msk [vmem:[%s306 + $0x18] sm:$0xff] %vm821, %v820
        %s826 = sand.u32 %s183, 1
        %s827 = scalar_lea.sflag [#allocation4], %s826
        %s828 = sand.u32 %s183, 1
        %s829 = smul.addr %s828, 32
        %s830 = scalar_lea.vmem [#allocation7], %s829
        // Predicated region
        $region57: #{tpu_custom_call.1} parent=47 // pred_check
          %p831 = pneg %p193
        $region58: #{tpu_custom_call.1} parent=47 // pred_check_branch
          %833 = sbr.rel (%p831) target = $region60
        $region59: #{tpu_custom_call.1} parent=47 // pred_region
          %s834 = smul.u32 4, %s23
          %836 = vsyncadd %s827, 0
          %s837 = smul.addr %s834, 8
          %s838 = scalar_lea.hbm %s7, %s837
          %s839 = sshll.u32 %s830, 4
          %s840 = int_to_ptr.vmem [resolvable:$true] %s839
          %s841 = sshll.u32 %s838, 4
          %s842 = int_to_ptr.hbm [resolvable:$true] %s841
          %847 = dma.vmem_to_hbm [thread:$0]  %s840, 512, %s842, %s827, 128, 128, 8
        $region60: #{tpu_custom_call.1} parent=47 // pred_fallthru
          _
      $region48: #{tpu_custom_call.1} parent=5 // pred_fallthru
        _
      %p848 = scmp.le.s32.totalorder 2, %s18
      // Predicated region
      $region61: #{tpu_custom_call.1} parent=5 // pred_check
        %p849 = pneg %p848
      $region62: #{tpu_custom_call.1} parent=5 // pred_check_branch
        %851 = sbr.rel (%p849) target = $region64
      $region63: #{tpu_custom_call.1} parent=5 // pred_region
        %s852 = ssub.s32 %s18, 2
        // Predicated region
        $region65: #{tpu_custom_call.1} parent=63 // pred_check
          %p853 = pneg %p199
        $region66: #{tpu_custom_call.1} parent=63 // pred_check_branch
          %855 = sbr.rel (%p853) target = $region68
        $region67: #{tpu_custom_call.1} parent=63 // pred_region
          %s856 = sand.u32 %s184, 1
          %s857 = scalar_lea.sflag [#allocation4], %s856
          %s858 = sand.u32 %s184, 1
          %s859 = smul.addr %s858, 32
          %s860 = scalar_lea.vmem [#allocation7], %s859
          %862 = dma.done %s857, 512
        $region68: #{tpu_custom_call.1} parent=63 // pred_fallthru
          _
      $region64: #{tpu_custom_call.1} parent=5 // pred_fallthru
        _
    $region6: #{tpu_custom_call.1} parent=1 // loop_footer
      %s22 = sadd.s32 1, %s18
    $region7: #{tpu_custom_call.1} parent=1 // loop_footer_branch
      %17 = sbr.rel target = $region3
    $region8: #{tpu_custom_call.1} parent=1 // loop_exit
      _
    %863 = vsyncpa [#allocation3], 1
    %s864 = scalar_lea.sflag [#allocation3], 1
    %865 = vsyncpa %s864, 1
    %866 = vsyncpa [#allocation6], 1
    %867 = vsyncpa [#allocation4], 1
    %s868 = scalar_lea.sflag [#allocation4], 1
    %869 = vsyncpa %s868, 1

</llo_original>
